<compile_context>
chip_gen: v5e
topology: v5e:2x2
jax: 0.10.0
libtpu: 0.0.40
codegen_flags: <defaults>
</compile_context>

<pallas_src>
import functools

import jax
import jax.numpy as jnp
from jax.experimental import pallas as pl
from jax.experimental.pallas import tpu as pltpu

_DMA_WINDOW = 8  # max row-gather DMAs in flight per output tile


def _embedding_gather_kernel(idx_ref, w_hbm, out_ref, sem, *, dma_window):
    # idx_ref : SMEM ref, (N_pad,) int32  -- scalar-prefetched token indices
    # w_hbm   : HBM ref,  (V, D)          -- embedding table, never copied whole
    # out_ref : VMEM ref, (tpb, D)        -- gathered rows for this tile
    # sem     : DMA semaphores, (dma_window,)
    tpb = out_ref.shape[0]
    W = dma_window
    base = pl.program_id(0) * tpb

    def start_row(t):
        row = idx_ref[base + t]
        pltpu.make_async_copy(
            w_hbm.at[pl.ds(row, 1), :],
            out_ref.at[pl.ds(t, 1), :],
            sem.at[t % W],
        ).start()

    def wait_row(t):
        # Descriptor only needs matching shapes/byte-count for the wait.
        pltpu.make_async_copy(
            w_hbm.at[pl.ds(0, 1), :],
            out_ref.at[pl.ds(t, 1), :],
            sem.at[t % W],
        ).wait()

    # Sliding window: keep up to W row-DMAs in flight.
    @pl.loop(0, tpb)
    def _(t):
        @pl.when(t >= W)
        def _():
            wait_row(t - W)

        start_row(t)

    # Drain the last W in-flight DMAs before the tile is written back to HBM.
    @pl.loop(tpb - W, tpb)
    def _(t):
        wait_row(t)


def embedding_forward(indices, weight, *, tokens_per_block=None,
                      dma_window=_DMA_WINDOW):
    """indices: (B, S) int; weight: (V, D) float -> (B, S, D) float."""
    B, S = indices.shape
    V, D = weight.shape
    N = B * S
    itemsize = jnp.dtype(weight.dtype).itemsize

    flat_idx = indices.reshape(N).astype(jnp.int32)
    # torch.nn.Embedding errors on OOB; TPU refs have no runtime bounds check,
    # so clamp defensively instead of reading stale/adjacent memory.
    flat_idx = jnp.clip(flat_idx, 0, V - 1)

    # Byte-budgeted tile size: ~2 MiB output tile, multiple of 8, in [8, 512].
    if tokens_per_block is None:
        target_bytes = 2 << 20
        tpb = max(8, min(512, target_bytes // (D * itemsize)))
        tpb = (tpb // 8) * 8
    else:
        tpb = tokens_per_block
    if N < tpb:
        tpb = max(8, ((N + 7) // 8) * 8)

    # Ragged tail: pad with index 0 (valid row) and slice the output afterward.
    pad = (-N) % tpb
    if pad:
        flat_idx = jnp.concatenate(
            [flat_idx, jnp.zeros((pad,), dtype=jnp.int32)], axis=0
        )
    N_pad = N + pad
    grid = (N_pad // tpb,)

    W = int(min(dma_window, tpb))

    # Explicit VMEM budget: double-buffered output tile + slack. The table
    # stays in HBM and costs no VMEM.
    tile_bytes = tpb * D * itemsize
    vmem_limit = int(min(100 << 20, max(8 << 20, 2 * tile_bytes + (2 << 20))))

    kernel = functools.partial(_embedding_gather_kernel, dma_window=W)

    out_flat = pl.pallas_call(
        kernel,
        out_shape=jax.ShapeDtypeStruct((N_pad, D), weight.dtype),
        grid_spec=pltpu.PrefetchScalarGridSpec(
            num_scalar_prefetch=1,          # flat_idx -> SMEM scalar reads
            grid=grid,
            in_specs=[
                # Full table stays in HBM; rows are DMA-gathered in-kernel.
                pl.BlockSpec(memory_space=pl.ANY),
            ],
            out_specs=pl.BlockSpec((tpb, D), lambda i, idx: (i, 0)),
            scratch_shapes=[pltpu.SemaphoreType.DMA((W,))],
        ),
        compiler_params=pltpu.CompilerParams(
            # Independent output tiles -> v7x's two TensorCores may split the grid.
            dimension_semantics=("parallel",),
            vmem_limit_bytes=vmem_limit,
        ),
    )(flat_idx, weight)

    return out_flat[:N].reshape(B, S, D)


def xavier_uniform_embedding(key, num_embeddings, embedding_dim, dtype=jnp.float32):
    # nn.init.xavier_uniform_ on a (V, D) tensor: fan_in = D, fan_out = V
    bound = (6.0 / (num_embeddings + embedding_dim)) ** 0.5
    return jax.random.uniform(
        key, (num_embeddings, embedding_dim), dtype=dtype, minval=-bound, maxval=bound
    )


if __name__ == "__main__":
    key = jax.random.PRNGKey(0)
    k_w, k_x = jax.random.split(key)

    num_embeddings = 64      # vocabulary size V
    embedding_dim = 128      # embedding dim D (lane-dense, multiple of 128)
    B, S = 2, 8              # batch, sequence

    weight = xavier_uniform_embedding(k_w, num_embeddings, embedding_dim)
    X = jax.random.randint(k_x, (B, S), 0, num_embeddings, dtype=jnp.int32)

    out = embedding_forward(X, weight)
    out = jax.block_until_ready(out)

    # correctness check against plain-JAX gather (same semantics as weight[X])
    ref = weight[X]
    assert out.shape == (B, S, embedding_dim)
    assert jnp.allclose(out, ref), "Pallas embedding mismatch vs reference gather"

    print("KERNEL_OK")
</pallas_src>

<mosaic_0001>
module attributes {stable_mosaic.version = 11 : i64} {
  func.func @_embedding_gather_kernel(%arg0: i32, %arg1: memref<16xi32, #tpu.memory_space<smem>>, %arg2: memref<64x128xf32, #tpu.memory_space<any>>, %arg3: memref<16x128xf32, #tpu.memory_space<vmem>>, %arg4: memref<8x!tpu.dma_semaphore, #tpu.memory_space<semaphore_mem>>) attributes {dimension_semantics = [#tpu.dimension_semantics<parallel>], iteration_bounds = array<i64: 1>, scalar_prefetch = 1 : i64, scratch_operands = 1 : i64, tpu.core_type = #tpu.core_type<tc>, window_params = [{}, {transform_indices = @transform_1, window_bounds = array<i64: 16, 128>}]} {
    %c16_i32 = arith.constant 16 : i32
    %0 = arith.muli %arg0, %c16_i32 : i32
    %c0_i32 = arith.constant 0 : i32
    %c16_i32_0 = arith.constant 16 : i32
    %1 = arith.addi %c0_i32, %c16_i32_0 : i32
    %c1_i32 = arith.constant 1 : i32
    scf.for %arg5 = %c0_i32 to %1 step %c1_i32  : i32 {
      %c1_i32_5 = arith.constant 1 : i32
      %3 = arith.muli %arg5, %c1_i32_5 : i32
      %c0_i32_6 = arith.constant 0 : i32
      %4 = arith.addi %c0_i32_6, %3 : i32
      %c8_i32_7 = arith.constant 8 : i32
      %5 = arith.cmpi sge, %4, %c8_i32_7 : i32
      %6 = arith.extui %5 : i1 to i32
      %c0_i32_8 = arith.constant 0 : i32
      %7 = arith.cmpi ne, %6, %c0_i32_8 : i32
      scf.if %7 {
        %c8_i32_17 = arith.constant 8 : i32
        %25 = arith.subi %4, %c8_i32_17 : i32
        %c8_i32_18 = arith.constant 8 : i32
        %c0_i32_19 = arith.constant 0 : i32
        %26 = arith.cmpi eq, %c8_i32_18, %c0_i32_19 : i32
        %c1_i32_20 = arith.constant 1 : i32
        %27 = arith.select %26, %c1_i32_20, %c8_i32_18 : i32
        %28 = arith.remsi %25, %27 : i32
        %c0_i32_21 = arith.constant 0 : i32
        %29 = arith.cmpi ne, %28, %c0_i32_21 : i32
        %c0_i32_22 = arith.constant 0 : i32
        %30 = arith.cmpi slt, %28, %c0_i32_22 : i32
        %c0_i32_23 = arith.constant 0 : i32
        %31 = arith.cmpi slt, %27, %c0_i32_23 : i32
        %32 = arith.xori %30, %31 : i1
        %33 = arith.andi %32, %29 : i1
        %34 = arith.addi %28, %27 : i32
        %35 = arith.select %33, %34, %28 : i32
        %c0_i32_24 = arith.constant 0 : i32
        %c0_i32_25 = arith.constant 0 : i32
        %36 = tpu.memref_slice %arg2[%c0_i32_24, %c0_i32_25] : memref<64x128xf32, #tpu.memory_space<any>> -> memref<1x128xf32, #tpu.memory_space<any>>
        %c0_i32_26 = arith.constant 0 : i32
        %37 = tpu.memref_slice %arg3[%25, %c0_i32_26] : memref<16x128xf32, #tpu.memory_space<vmem>> -> memref<1x128xf32, #tpu.memory_space<vmem>>
        %38 = tpu.memref_slice %arg4[%35] : memref<8x!tpu.dma_semaphore, #tpu.memory_space<semaphore_mem>> -> memref<1x!tpu.dma_semaphore, #tpu.memory_space<semaphore_mem>>
        %39 = tpu.memref_squeeze %38 : memref<1x!tpu.dma_semaphore, #tpu.memory_space<semaphore_mem>> -> memref<!tpu.dma_semaphore, #tpu.memory_space<semaphore_mem>>
        tpu.wait_dma2 semaphore(%39 : memref<!tpu.dma_semaphore, #tpu.memory_space<semaphore_mem>>) src(%36 : memref<1x128xf32, #tpu.memory_space<any>>) dst(%37 : memref<1x128xf32, #tpu.memory_space<vmem>>)
      } else {
      }
      %8 = arith.addi %0, %4 : i32
      %9 = arith.index_cast %8 : i32 to index
      %10 = memref.load %arg1[%9] : memref<16xi32, #tpu.memory_space<smem>>
      %c8_i32_9 = arith.constant 8 : i32
      %c0_i32_10 = arith.constant 0 : i32
      %11 = arith.cmpi eq, %c8_i32_9, %c0_i32_10 : i32
      %c1_i32_11 = arith.constant 1 : i32
      %12 = arith.select %11, %c1_i32_11, %c8_i32_9 : i32
      %13 = arith.remsi %4, %12 : i32
      %c0_i32_12 = arith.constant 0 : i32
      %14 = arith.cmpi ne, %13, %c0_i32_12 : i32
      %c0_i32_13 = arith.constant 0 : i32
      %15 = arith.cmpi slt, %13, %c0_i32_13 : i32
      %c0_i32_14 = arith.constant 0 : i32
      %16 = arith.cmpi slt, %12, %c0_i32_14 : i32
      %17 = arith.xori %15, %16 : i1
      %18 = arith.andi %17, %14 : i1
      %19 = arith.addi %13, %12 : i32
      %20 = arith.select %18, %19, %13 : i32
      %c0_i32_15 = arith.constant 0 : i32
      %21 = tpu.memref_slice %arg2[%10, %c0_i32_15] : memref<64x128xf32, #tpu.memory_space<any>> -> memref<1x128xf32, #tpu.memory_space<any>>
      %c0_i32_16 = arith.constant 0 : i32
      %22 = tpu.memref_slice %arg3[%4, %c0_i32_16] : memref<16x128xf32, #tpu.memory_space<vmem>> -> memref<1x128xf32, #tpu.memory_space<vmem>>
      %23 = tpu.memref_slice %arg4[%20] : memref<8x!tpu.dma_semaphore, #tpu.memory_space<semaphore_mem>> -> memref<1x!tpu.dma_semaphore, #tpu.memory_space<semaphore_mem>>
      %24 = tpu.memref_squeeze %23 : memref<1x!tpu.dma_semaphore, #tpu.memory_space<semaphore_mem>> -> memref<!tpu.dma_semaphore, #tpu.memory_space<semaphore_mem>>
      tpu.enqueue_dma source(%21 : memref<1x128xf32, #tpu.memory_space<any>>) target(%22 : memref<1x128xf32, #tpu.memory_space<vmem>>) target_semaphore(%24 : memref<!tpu.dma_semaphore, #tpu.memory_space<semaphore_mem>>)
    }
    %c16_i32_1 = arith.constant 16 : i32
    %c0_i32_2 = arith.constant 0 : i32
    %c8_i32 = arith.constant 8 : i32
    %2 = arith.addi %c0_i32_2, %c8_i32 : i32
    %c1_i32_3 = arith.constant 1 : i32
    scf.for %arg5 = %c0_i32_2 to %2 step %c1_i32_3  : i32 {
      %c1_i32_5 = arith.constant 1 : i32
      %3 = arith.muli %arg5, %c1_i32_5 : i32
      %c8_i32_6 = arith.constant 8 : i32
      %4 = arith.addi %c8_i32_6, %3 : i32
      %c8_i32_7 = arith.constant 8 : i32
      %c0_i32_8 = arith.constant 0 : i32
      %5 = arith.cmpi eq, %c8_i32_7, %c0_i32_8 : i32
      %c1_i32_9 = arith.constant 1 : i32
      %6 = arith.select %5, %c1_i32_9, %c8_i32_7 : i32
      %7 = arith.remsi %4, %6 : i32
      %c0_i32_10 = arith.constant 0 : i32
      %8 = arith.cmpi ne, %7, %c0_i32_10 : i32
      %c0_i32_11 = arith.constant 0 : i32
      %9 = arith.cmpi slt, %7, %c0_i32_11 : i32
      %c0_i32_12 = arith.constant 0 : i32
      %10 = arith.cmpi slt, %6, %c0_i32_12 : i32
      %11 = arith.xori %9, %10 : i1
      %12 = arith.andi %11, %8 : i1
      %13 = arith.addi %7, %6 : i32
      %14 = arith.select %12, %13, %7 : i32
      %c0_i32_13 = arith.constant 0 : i32
      %c0_i32_14 = arith.constant 0 : i32
      %15 = tpu.memref_slice %arg2[%c0_i32_13, %c0_i32_14] : memref<64x128xf32, #tpu.memory_space<any>> -> memref<1x128xf32, #tpu.memory_space<any>>
      %c0_i32_15 = arith.constant 0 : i32
      %16 = tpu.memref_slice %arg3[%4, %c0_i32_15] : memref<16x128xf32, #tpu.memory_space<vmem>> -> memref<1x128xf32, #tpu.memory_space<vmem>>
      %17 = tpu.memref_slice %arg4[%14] : memref<8x!tpu.dma_semaphore, #tpu.memory_space<semaphore_mem>> -> memref<1x!tpu.dma_semaphore, #tpu.memory_space<semaphore_mem>>
      %18 = tpu.memref_squeeze %17 : memref<1x!tpu.dma_semaphore, #tpu.memory_space<semaphore_mem>> -> memref<!tpu.dma_semaphore, #tpu.memory_space<semaphore_mem>>
      tpu.wait_dma2 semaphore(%18 : memref<!tpu.dma_semaphore, #tpu.memory_space<semaphore_mem>>) src(%15 : memref<1x128xf32, #tpu.memory_space<any>>) dst(%16 : memref<1x128xf32, #tpu.memory_space<vmem>>)
    }
    %c8_i32_4 = arith.constant 8 : i32
    return
  }
  func.func @transform_1(%arg0: i32, %arg1: memref<16xi32, #tpu.memory_space<smem>>) -> (i32, i32) {
    %c0_i32 = arith.constant 0 : i32
    %c0_i32_0 = arith.constant 0 : i32
    return %arg0, %c0_i32 : i32, i32
  }
}

</mosaic_0001>

<llo_original>
// kernel: tpu_custom_call.1
$region0: #{tpu_custom_call.1}
  #allocation0 [shape = 'u32[]', space=smem, size = 0x4, offset = 0x4, fixed_abs, tag = 'smem constant byte address 0x4 - core index']
  #allocation1 [shape = 'u32[72,128]{1,0:T(1,128)}', space=vmem, size = 0x9000, scoped, tag = 'internal scratch']
  #allocation2 [shape = 's32[8]{0}', space=sflag, size = 0x20, scoped, tag = 'scratch operand']
  #allocation3 [shape = 's32[1]{0}', space=sflag, size = 0x4, scoped, tag = 'scoped memory for tpu_custom_call.1']
  #allocation4 [shape = 'u8[512]{0}', space=smem, size = 0x200, scoped, tag = 'prefetched SMEM operand 0']
  #allocation7 [shape = 's32[]', space=sflag, size = 0x4, offset = 0, fixed_abs, tag = 'sflag constant byte address 0x0 - dummy sync flag']
  #allocation8 [shape = 's32[]', space=sflag, size = 0x4, offset = 0, fixed_abs, tag = 'sflag constant byte address 0x0 - dummy sync flag']
  #allocation9 [shape = 'u32[]', space=smem, size = 0x4, offset = 0x44, fixed_abs, tag = 'smem constant byte address 0x44 - assertion arg 0']
  #allocation10 [shape = 'u32[]', space=smem, size = 0x4, offset = 0x48, fixed_abs, tag = 'smem constant byte address 0x48 - assertion arg 1']
  %s0 = inlined_call_operand.hbm [shape: s32[16], index: 0, kind: input, shape index: {}]
  %s1 = inlined_call_operand.hbm [shape: f32[64,128], index: 1, kind: input, shape index: {}]
  %s2 = inlined_call_operand.hbm [shape: f32[16,128], index: 2, kind: output, shape index: {}]
  %s3 = sld [smem:[#allocation0]]
  $region32: #{tpu_custom_call.1} parent=0
    _
  %s5 = ssub.s32 1, %s3
  %s6 = scalar_select 0, %s5, %s3
  %s8 = sshll.u32 %s0, 4
  %s9 = int_to_ptr.hbm [resolvable:$true] %s8
  %11 = dma.hbm_to_smem %s9, 16, [#allocation4], [#allocation3]
  %13 = dma.done [#allocation3], 16
  %14 = sfence
  $region1: #{tpu_custom_call.1} parent=0
    #allocation5 [shape = 'u8[8192]{0}', space=vmem, size = 0x2000, scoped, tag = 'output window, operand 0, single buffered']
    #allocation6 [shape = 's32[1]{0}', space=sflag, size = 0x4, scoped, tag = 'scoped memory for tpu_custom_call.1']
    %15 = vsyncpa [#allocation6], 0
    %s16 = smul.u32 0, 16
    loop: start=0, step=1, limit=16
    $region2: #{tpu_custom_call.1} parent=1 // loop_pre_header
      _
    $region3: #{tpu_custom_call.1} parent=1 // loop_header
      %s18 = sphi 0, %s22
      %p19 = scmp.ge.s32.totalorder %s18, 16
    $region4: #{tpu_custom_call.1} parent=1 // loop_header_branch
      %21 = sbr.rel (%p19) target = $region8
    $region5: #{tpu_custom_call.1} parent=1 // loop_body
      %p23 = scmp.ge.s32.totalorder %s18, 8
      // Predicated region
      $region9: #{tpu_custom_call.1} parent=5 // pred_check
        %p24 = pneg %p23
      $region10: #{tpu_custom_call.1} parent=5 // pred_check_branch
        %26 = sbr.rel (%p24) target = $region12
      $region11: #{tpu_custom_call.1} parent=5 // pred_region
        %s27 = ssub.s32 %s18, 8
        %p28 = scmp.lt.s32.totalorder %s27, 0
        %s29 = ssub.s32 0, %s27
        %s30 = scalar_select %p28, %s29, %s27
        %s31 = sand.u32 %s30, 7
        %s32 = ssub.s32 0, %s31
        %s33 = scalar_select %p28, %s32, %s31
        %p34 = scmp.ne.s32.totalorder %s33, 0
        %p35 = scmp.lt.s32.totalorder %s33, 0
        %p36 = pnand %p35, %p34
        %p37 = pneg %p36
        %s38 = sadd.s32 %s33, 8
        %s39 = scalar_select %p37, %s38, %s33
        %s40 = scalar_lea.sflag [#allocation2], %s39
        %s41 = smul.u32 1, 1
        %s42 = sshll.u32 %s41, 4
        %43 = dma.done %s40, %s42
      $region12: #{tpu_custom_call.1} parent=5 // pred_fallthru
        _
      %s44 = sadd.s32 %s16, %s18
      %s45 = sld [smem:[#allocation4 + %s44]]
      %p46 = scmp.lt.s32.totalorder %s18, 0
      %s47 = ssub.s32 0, %s18
      %s48 = scalar_select %p46, %s47, %s18
      %s49 = sand.u32 %s48, 7
      %s50 = ssub.s32 0, %s49
      %s51 = scalar_select %p46, %s50, %s49
      %p52 = scmp.ne.s32.totalorder %s51, 0
      %p53 = scmp.lt.s32.totalorder %s51, 0
      %p54 = pnand %p53, %p52
      %p55 = pneg %p54
      %s56 = sadd.s32 %s51, 8
      %s57 = scalar_select %p55, %s56, %s51
      %s58 = scalar_lea.hbm %s1, %s45
      %s59 = scalar_lea.vmem [#allocation5], %s18
      %s60 = scalar_lea.sflag [#allocation2], %s57
      // Predicated region
      $region13: #{tpu_custom_call.1} parent=5 // pred_check
        _
      $region14: #{tpu_custom_call.1} parent=5 // pred_check_branch
        %62 = sbr.rel target = $region16
      $region15: #{tpu_custom_call.1} parent=5 // pred_region
        %63 = sst [smem:[#allocation9]] [#allocation8]
        %64 = sst [smem:[#allocation10]] [#allocation7]
      $region16: #{tpu_custom_call.1} parent=5 // pred_fallthru
        _
      %66 = shalt.err (0)
      %s68 = sshll.u32 %s58, 4
      %s69 = int_to_ptr.hbm [resolvable:$true] %s68
      %s70 = sshll.u32 %s59, 4
      %s71 = int_to_ptr.vmem [resolvable:$true] %s70
      %73 = dma.hbm_to_vmem [thread:$0]  %s69, 16, %s71, %s60
    $region6: #{tpu_custom_call.1} parent=1 // loop_footer
      %s22 = sadd.s32 1, %s18
    $region7: #{tpu_custom_call.1} parent=1 // loop_footer_branch
      %17 = sbr.rel target = $region3
    $region8: #{tpu_custom_call.1} parent=1 // loop_exit
      _
    loop: start=0, step=1, limit=8
    $region17: #{tpu_custom_call.1} parent=1 // loop_pre_header
      _
    $region18: #{tpu_custom_call.1} parent=1 // loop_header
      %s75 = sphi 0, %s79
      %p76 = scmp.ge.s32.totalorder %s75, 8
    $region19: #{tpu_custom_call.1} parent=1 // loop_header_branch
      %78 = sbr.rel (%p76) target = $region23
    $region20: #{tpu_custom_call.1} parent=1 // loop_body
      %s80 = sadd.s32 %s75, 8
      %p81 = scmp.lt.s32.totalorder %s80, 0
      %s82 = ssub.s32 0, %s80
      %s83 = scalar_select %p81, %s82, %s80
      %s84 = sand.u32 %s83, 7
      %s85 = ssub.s32 0, %s84
      %s86 = scalar_select %p81, %s85, %s84
      %p87 = scmp.ne.s32.totalorder %s86, 0
      %p88 = scmp.lt.s32.totalorder %s86, 0
      %p89 = pnand %p88, %p87
      %p90 = pneg %p89
      %s91 = sadd.s32 %s86, 8
      %s92 = scalar_select %p90, %s91, %s86
      %s93 = scalar_lea.sflag [#allocation2], %s92
      %s94 = smul.u32 1, 1
      %s95 = sshll.u32 %s94, 4
      %96 = dma.done %s93, %s95
    $region21: #{tpu_custom_call.1} parent=1 // loop_footer
      %s79 = sadd.s32 1, %s75
    $region22: #{tpu_custom_call.1} parent=1 // loop_footer_branch
      %74 = sbr.rel target = $region18
    $region23: #{tpu_custom_call.1} parent=1 // loop_exit
      _
    // Predicated region
    $region24: #{tpu_custom_call.1} parent=1 // pred_check
      _
    $region25: #{tpu_custom_call.1} parent=1 // pred_check_branch
      %98 = sbr.rel (0) target = $region27
    $region26: #{tpu_custom_call.1} parent=1 // pred_region
      %100 = vsyncadd [#allocation6], 0
      %s101 = sshll.u32 [#allocation5], 4
      %s102 = int_to_ptr.vmem [resolvable:$true] %s101
      %s103 = sshll.u32 %s2, 4
      %s104 = int_to_ptr.hbm [resolvable:$true] %s103
      %109 = dma.vmem_to_hbm [thread:$0]  %s102, 256, %s104, [#allocation6], 128, 128, 8
    $region27: #{tpu_custom_call.1} parent=1 // pred_fallthru
      _
    // Predicated region
    $region28: #{tpu_custom_call.1} parent=1 // pred_check
      _
    $region29: #{tpu_custom_call.1} parent=1 // pred_check_branch
      %111 = sbr.rel (0) target = $region31
    $region30: #{tpu_custom_call.1} parent=1 // pred_region
      %113 = dma.done [#allocation6], 256
    $region31: #{tpu_custom_call.1} parent=1 // pred_fallthru
      _
    %114 = vsyncpa [#allocation6], 1
  %115 = vsyncmov [#allocation2]
  %s116 = vpop.sfrf %115
  %p117 = scmp.eq.s32.totalorder %s116, 0
  %p118 = pneg %p117
  %120 = shalt.err (%p118)
  %s121 = scalar_lea.sflag [#allocation2], 1
  %122 = vsyncmov %s121
  %s123 = vpop.sfrf %122
  %p124 = scmp.eq.s32.totalorder %s123, 0
  %p125 = pneg %p124
  %127 = shalt.err (%p125)
  %s128 = scalar_lea.sflag [#allocation2], 2
  %129 = vsyncmov %s128
  %s130 = vpop.sfrf %129
  %p131 = scmp.eq.s32.totalorder %s130, 0
  %p132 = pneg %p131
  %134 = shalt.err (%p132)
  %s135 = scalar_lea.sflag [#allocation2], 3
  %136 = vsyncmov %s135
  %s137 = vpop.sfrf %136
  %p138 = scmp.eq.s32.totalorder %s137, 0
  %p139 = pneg %p138
  %141 = shalt.err (%p139)
  %s142 = scalar_lea.sflag [#allocation2], 4
  %143 = vsyncmov %s142
  %s144 = vpop.sfrf %143
  %p145 = scmp.eq.s32.totalorder %s144, 0
  %p146 = pneg %p145
  %148 = shalt.err (%p146)
  %s149 = scalar_lea.sflag [#allocation2], 5
  %150 = vsyncmov %s149
  %s151 = vpop.sfrf %150
  %p152 = scmp.eq.s32.totalorder %s151, 0
  %p153 = pneg %p152
  %155 = shalt.err (%p153)
  %s156 = scalar_lea.sflag [#allocation2], 6
  %157 = vsyncmov %s156
  %s158 = vpop.sfrf %157
  %p159 = scmp.eq.s32.totalorder %s158, 0
  %p160 = pneg %p159
  %162 = shalt.err (%p160)
  %s163 = scalar_lea.sflag [#allocation2], 7
  %164 = vsyncmov %s163
  %s165 = vpop.sfrf %164
  %p166 = scmp.eq.s32.totalorder %s165, 0
  %p167 = pneg %p166
  %169 = shalt.err (%p167)

</llo_original>
